<compile_context>
chip_gen: v6e
topology: v6e:2x2x1
jax: 0.10.0
libtpu: 0.0.40
codegen_flags: <defaults>
</compile_context>

<pallas_src>
import jax
import jax.numpy as jnp
from jax.experimental import pallas as pl
from jax.experimental.pallas import tpu as pltpu

_LANE = 128
_MAX_UNROLL_GROUPS = 32


def gridmask_kernel(mask_ref, img_ref, out_ref):
    """mask_ref: (sub, HWc) resident tile; img_ref/out_ref: (TB, HWc) tiles."""
    tb = out_ref.shape[0]
    sub = mask_ref.shape[0]
    m = mask_ref[...]
    if pl.cdiv(tb, sub) <= _MAX_UNROLL_GROUPS:
        # One vreg-vs-vreg multiply per sublane group -> no runtime broadcast.
        for g0 in range(0, tb, sub):
            glen = min(sub, tb - g0)
            out_ref[pl.ds(g0, glen), :] = (
                img_ref[pl.ds(g0, glen), :] * m[:glen, :]
            )
    else:
        # Huge row blocks (tiny HW, big batch): single broadcast multiply.
        # Still HBM-bound; the sublane broadcast hides under the DMA.
        out_ref[...] = img_ref[...] * m[:1, :]


def _sublane_multiple(dtype):
    """Packed-vreg sublane count: 8 for f32, 16 for bf16, 32 for int8/fp8."""
    return max(8, 32 // jnp.dtype(dtype).itemsize)


def _build_mask(H, W, d, st_h, st_w, ratio, dtype, hw_pad, sub):
    """(sub, hw_pad) GridMask keep-mask replicated over one sublane group."""
    hh, ww = int(1.5 * H), int(1.5 * W)
    off_h, off_w = (hh - H) // 2, (ww - W) // 2
    l = int(d * ratio + 0.5)
    rows = jnp.arange(H, dtype=jnp.int32)[:, None] + off_h
    cols = jnp.arange(W, dtype=jnp.int32)[None, :] + off_w
    # floor-mod (jnp.mod), NOT truncating rem: operands can be negative.
    keep = jnp.logical_or(
        jnp.mod(rows - st_h, d) < l,
        jnp.mod(cols - st_w, d) < l,
    ).astype(dtype).reshape(H * W)
    if hw_pad != H * W:
        keep = jnp.pad(keep, (0, hw_pad - H * W))
    return jnp.tile(keep[None, :], (sub, 1))


def _device_budget():
    """(block_target_bytes, vmem_limit_bytes) for the local TPU generation."""
    try:
        cap = pltpu.get_tpu_info().vmem_capacity_bytes
    except Exception:
        cap = None
    if cap is None:
        return 4 * 1024 * 1024, 48 * 1024 * 1024       # unknown: safe everywhere
    if cap <= 96 * 1024 * 1024:                         # v7x-class: 64 MiB / TC
        return 6 * 1024 * 1024, 48 * 1024 * 1024
    return 8 * 1024 * 1024, 64 * 1024 * 1024            # v5e / v6e: 128 MiB


def _choose_tiles(nc, hw, itemsize, target_bytes, sub):
    """Pick (tb, hw_chunk) row/lane block sizes for the (nc, hw) stream.

    hw is already a multiple of 128.  Blocks target ~target_bytes so that
    double-buffered in+out (+ the small resident mask) fits the VMEM limit,
    and the grid gets >= 2 steps whenever legal (v7x megacore).
    """
    # Lane axis: full rows when one sublane group fits the budget, otherwise
    # chunk in multiples of 128 lanes (large-image fallback).
    if sub * hw * itemsize > target_bytes:
        hw_chunk = max(_LANE, (target_bytes // (sub * itemsize)) // _LANE * _LANE)
    else:
        hw_chunk = hw

    # Row axis: as many sublane groups as fit the budget; prefer a block that
    # divides nc so the tail block is not padded (unmasked full-vreg stores).
    max_tb = max(sub, (target_bytes // (hw_chunk * itemsize)) // sub * sub)
    if nc <= max_tb:
        tb = nc
    else:
        tb = max_tb
        for cand in range(max_tb, sub - 1, -sub):
            if nc % cand == 0:
                tb = cand
                break

    # Megacore: guarantee >= 2 grid steps when legally possible so v7x's
    # second TensorCore gets work.
    if pl.cdiv(nc, tb) * pl.cdiv(hw, hw_chunk) < 2:
        if nc >= 2 * sub:
            tb = (pl.cdiv(nc, 2) + sub - 1) // sub * sub
        elif hw >= 2 * _LANE:
            hw_chunk = (pl.cdiv(hw, 2) + _LANE - 1) // _LANE * _LANE

    return tb, hw_chunk


def gridmask_forward(img, d, st_h, st_w, ratio=0.5):
    """img: (N, C, H, W). Returns img * mask (mask broadcast over N, C)."""
    N, C, H, W = img.shape
    d, st_h, st_w = int(d), int(st_h), int(st_w)
    if d <= 0:
        raise ValueError(f"GridMask requires d > 0, got d={d}")

    nc, hw = N * C, H * W
    itemsize = jnp.dtype(img.dtype).itemsize
    sub = _sublane_multiple(img.dtype)

    # Lane-dense layout: pad the flattened spatial dim to a multiple of 128.
    hw_pad = pl.cdiv(hw, _LANE) * _LANE
    img_flat = img.reshape(nc, hw)
    if hw_pad != hw:
        img_flat = jnp.pad(img_flat, ((0, 0), (0, hw_pad - hw)))

    mask = _build_mask(H, W, d, st_h, st_w, ratio, img.dtype, hw_pad, sub)

    target_bytes, vmem_limit = _device_budget()
    tb, hw_chunk = _choose_tiles(nc, hw_pad, itemsize, target_bytes, sub)
    grid = (pl.cdiv(hw_pad, hw_chunk), pl.cdiv(nc, tb))   # HW-chunk axis outer

    out_flat = pl.pallas_call(
        gridmask_kernel,
        out_shape=jax.ShapeDtypeStruct((nc, hw_pad), img.dtype),
        grid=grid,
        in_specs=[
            # Mask: indexed only by the outer lane-chunk axis -> stays
            # resident in VMEM across the whole inner row sweep.
            pl.BlockSpec((sub, hw_chunk), lambda j, i: (0, j)),
            pl.BlockSpec((tb, hw_chunk), lambda j, i: (i, j)),
        ],
        out_specs=pl.BlockSpec((tb, hw_chunk), lambda j, i: (i, j)),
        input_output_aliases={1: 0},   # donate img_flat -> halve HBM footprint
        compiler_params=pltpu.CompilerParams(
            dimension_semantics=("parallel", "parallel"),  # megacore on v7x
            vmem_limit_bytes=vmem_limit,
        ),
        cost_estimate=pl.CostEstimate(
            flops=nc * hw_pad,
            bytes_accessed=(2 * nc + sub) * hw_pad * itemsize,
            transcendentals=0,
        ),
    )(mask, img_flat)

    if hw_pad != hw:
        out_flat = out_flat[:, :hw]
    return out_flat.reshape(N, C, H, W)


def gridmask_reference(img, d, st_h, st_w, ratio=0.5):
    """Pure-JAX reference mirroring the torch/numpy forward (rotate r=0)."""
    N, C, H, W = img.shape
    hh, ww = int(1.5 * H), int(1.5 * W)
    off_h, off_w = (hh - H) // 2, (ww - W) // 2
    l = int(d * ratio + 0.5)
    rows = jnp.arange(H)[:, None] + off_h
    cols = jnp.arange(W)[None, :] + off_w
    mask = jnp.logical_or(
        jnp.mod(rows - st_h, d) < l, jnp.mod(cols - st_w, d) < l
    ).astype(img.dtype)
    return img * mask[None, None, :, :]


if __name__ == "__main__":
    key = jax.random.PRNGKey(0)
    k_img, k_d, k_sh, k_sw = jax.random.split(key, 4)

    # Small, image-appropriate GridMask params (d_min=4, d_max=8, ratio=0.5,
    # rotate=1 -> identity rotation, prob=1 -> always applied).
    N, C, H, W = 2, 4, 16, 16
    d_min, d_max, ratio = 4, 8, 0.5

    img = jax.random.normal(k_img, (N, C, H, W), dtype=jnp.float32)
    d = int(jax.random.randint(k_d, (), d_min, d_max))
    st_h = int(jax.random.randint(k_sh, (), 0, d))
    st_w = int(jax.random.randint(k_sw, (), 0, d))

    # Compute the reference BEFORE the kernel (img_flat is donated inside).
    ref = gridmask_reference(img, d, st_h, st_w, ratio)

    out = gridmask_forward(img, d, st_h, st_w, ratio)
    out = jax.block_until_ready(out)

    assert out.shape == img.shape and out.dtype == img.dtype
    assert jnp.allclose(out, ref), "Pallas GridMask mismatch vs reference"

    print("KERNEL_OK")
</pallas_src>

<mosaic_0001>
module attributes {stable_mosaic.version = 11 : i64} {
  func.func @gridmask_kernel(%arg0: i32, %arg1: i32, %arg2: memref<8x128xf32, #tpu.memory_space<vmem>>, %arg3: memref<8x128xf32, #tpu.memory_space<vmem>>, %arg4: memref<8x128xf32, #tpu.memory_space<vmem>>) attributes {dimension_semantics = [#tpu.dimension_semantics<parallel>, #tpu.dimension_semantics<parallel>], iteration_bounds = array<i64: 2, 1>, scalar_prefetch = 0 : i64, scratch_operands = 0 : i64, tpu.core_type = #tpu.core_type<tc>, window_params = [{transform_indices = @transform_0, window_bounds = array<i64: 8, 128>}, {transform_indices = @transform_1, window_bounds = array<i64: 8, 128>}, {transform_indices = @transform_2, window_bounds = array<i64: 8, 128>}]} {
    %c0 = arith.constant 0 : index
    %c0_0 = arith.constant 0 : index
    %0 = vector.load %arg2[%c0, %c0_0] : memref<8x128xf32, #tpu.memory_space<vmem>>, vector<8x128xf32>
    %c0_1 = arith.constant 0 : index
    %c0_2 = arith.constant 0 : index
    %1 = vector.load %arg3[%c0_1, %c0_2] : memref<8x128xf32, #tpu.memory_space<vmem>>, vector<8x128xf32>
    %2 = arith.mulf %1, %0 : vector<8x128xf32>
    %c0_3 = arith.constant 0 : index
    %c0_4 = arith.constant 0 : index
    %3 = vector.load %arg4[%c0_3, %c0_4] : memref<8x128xf32, #tpu.memory_space<vmem>>, vector<8x128xf32>
    tpu.vector_store %arg4[%c0_3, %c0_4], %2 {strides = array<i32>} : memref<8x128xf32, #tpu.memory_space<vmem>>, vector<8x128xf32>,
    return
  }
  func.func @transform_0(%arg0: i32, %arg1: i32) -> (i32, i32) {
    %c0_i32 = arith.constant 0 : i32
    %c0_i32_0 = arith.constant 0 : i32
    return %c0_i32, %arg0 : i32, i32
  }
  func.func @transform_1(%arg0: i32, %arg1: i32) -> (i32, i32) {
    %c0_i32 = arith.constant 0 : i32
    return %arg1, %arg0 : i32, i32
  }
  func.func @transform_2(%arg0: i32, %arg1: i32) -> (i32, i32) {
    %c0_i32 = arith.constant 0 : i32
    return %arg1, %arg0 : i32, i32
  }
}

</mosaic_0001>

<llo_original>
// kernel: tpu_custom_call.1
$region0: #{tpu_custom_call.1}
  #allocation0 [shape = 'u32[]', space=smem, size = 0x4, offset = 0x4, fixed_abs, tag = 'smem constant byte address 0x4 - core index']
  #allocation1 [shape = 'u32[144,128]{1,0:T(1,128)}', space=vmem, size = 0x12000, scoped, tag = 'internal scratch']
  %s0 = inlined_call_operand.vmem [shape: f32[8,256], index: 0, kind: input, shape index: {}]
  %s1 = inlined_call_operand.hbm [shape: f32[8,256], index: 1, kind: input, shape index: {}, may-alias: {1,2}]
  %s2 = inlined_call_operand.hbm [shape: f32[8,256], index: 2, kind: output, shape index: {}, may-alias: {1,2}]
  %s3 = sld [smem:[#allocation0]]
  $region45: #{tpu_custom_call.1} parent=0
    _
  %s5 = ssub.s32 1, %s3
  %s6 = scalar_select 0, %s5, %s3
  $region1: #{tpu_custom_call.1} parent=0
    #allocation2 [shape = 'u8[8192]{0}', space=vmem, size = 0x2000, scoped, tag = 'input window, operand 1']
    #allocation3 [shape = 's32[2]{0}', space=sflag, size = 0x8, scoped, tag = 'scoped memory for tpu_custom_call.1']
    #allocation4 [shape = 's32[2]{0}', space=sflag, size = 0x8, scoped, tag = 'scoped memory for tpu_custom_call.1']
    #allocation5 [shape = 'u8[8192]{0}', space=vmem, size = 0x2000, scoped, tag = 'output window, operand 0']
    %7 = vsyncpa [#allocation3], 0
    %s8 = scalar_lea.sflag [#allocation3], 1
    %9 = vsyncpa %s8, 0
    %10 = vsyncpa [#allocation4], 0
    %s11 = scalar_lea.sflag [#allocation4], 1
    %12 = vsyncpa %s11, 0
    loop: start=0, step=1, limit=4
    $region2: #{tpu_custom_call.1} parent=1 // loop_pre_header
      _
    $region3: #{tpu_custom_call.1} parent=1 // loop_header
      %s14 = sphi 0, %s18
      %p15 = scmp.ge.s32.totalorder %s14, 4
      %s21 = sphi 0, %s33
      %s22 = sphi 0, %s29
      %s23 = sphi 0, %s21
      %s24 = sphi 0, %s22
      %s25 = sphi 0, %s23
      %s26 = sphi 0, %s24
      %s36 = sphi 0, %s38
      %s39 = sphi 0, %s36
      %s40 = sphi 0, %s39
      %s56 = sphi 0, %s40
      %s64 = sphi 0, %s66
      %s67 = sphi 0, %s64
      %s68 = sphi 0, %s67
      %s84 = sphi 0, %s68
      %s92 = sphi 0, %s94
      %s95 = sphi 0, %s92
      %s96 = sphi 0, %s95
      %s112 = sphi 0, %s96
    $region4: #{tpu_custom_call.1} parent=1 // loop_header_branch
      %17 = sbr.rel (%p15) target = $region8
    $region5: #{tpu_custom_call.1} parent=1 // loop_body
      %s19 = ssub.s32 %s14, 1
      %s20 = ssub.s32 %s14, 2
      %s27 = sadd.s32 1, %s22
      %p28 = scmp.ge.s32.totalorder %s27, 1
      %s29 = scalar_select %p28, 0, %s27
      %s30 = sadd.s32 1, %s21
      %s31 = scalar_select %p28, %s30, %s21
      %p32 = scmp.ge.s32.totalorder %s31, 2
      %s33 = scalar_select %p32, 0, %s31
      %s34 = ssub.s32 %s21, %s33
      %p35 = scmp.eq.s32.totalorder %s34, 0
      %s37 = sadd.s32 %s36, 1
      %s38 = scalar_select %p35, %s36, %s37
      %p41 = pneg %p35
      %p42 = scmp.eq.s32.totalorder %s14, 1
      %p43 = por %p41, %p42
      %p44 = scmp.ne.s32.totalorder %s36, %s39
      %p45 = scmp.eq.s32.totalorder %s14, 0
      %p46 = por %p44, %p45
      %p47 = scmp.ne.s32.totalorder %s36, %s39
      %p48 = scmp.eq.s32.totalorder %s19, 1
      %p49 = por %p47, %p48
      %p50 = scmp.ne.s32.totalorder %s39, %s40
      %p51 = scmp.eq.s32.totalorder %s19, 0
      %p52 = por %p50, %p51
      %p53 = scmp.ne.s32.totalorder %s39, %s40
      %p54 = scmp.eq.s32.totalorder %s20, 1
      %p55 = por %p53, %p54
      %p57 = scmp.ne.s32.totalorder %s40, %s56
      %p58 = scmp.eq.s32.totalorder %s20, 0
      %p59 = por %p57, %p58
      %s60 = ssub.s32 %s22, %s29
      %s61 = ssub.s32 %s21, %s33
      %s62 = sor.u32 %s60, %s61
      %p63 = scmp.eq.s32.totalorder %s62, 0
      %s65 = sadd.s32 %s64, 1
      %s66 = scalar_select %p63, %s64, %s65
      %p69 = pneg %p63
      %p70 = scmp.eq.s32.totalorder %s14, 1
      %p71 = por %p69, %p70
      %p72 = scmp.ne.s32.totalorder %s64, %s67
      %p73 = scmp.eq.s32.totalorder %s14, 0
      %p74 = por %p72, %p73
      %p75 = scmp.ne.s32.totalorder %s64, %s67
      %p76 = scmp.eq.s32.totalorder %s19, 1
      %p77 = por %p75, %p76
      %p78 = scmp.ne.s32.totalorder %s67, %s68
      %p79 = scmp.eq.s32.totalorder %s19, 0
      %p80 = por %p78, %p79
      %p81 = scmp.ne.s32.totalorder %s67, %s68
      %p82 = scmp.eq.s32.totalorder %s20, 1
      %p83 = por %p81, %p82
      %p85 = scmp.ne.s32.totalorder %s68, %s84
      %p86 = scmp.eq.s32.totalorder %s20, 0
      %p87 = por %p85, %p86
      %s88 = ssub.s32 %s22, %s29
      %s89 = ssub.s32 %s21, %s33
      %s90 = sor.u32 %s88, %s89
      %p91 = scmp.eq.s32.totalorder %s90, 0
      %s93 = sadd.s32 %s92, 1
      %s94 = scalar_select %p91, %s92, %s93
      %p97 = pneg %p91
      %p98 = scmp.eq.s32.totalorder %s14, 1
      %p99 = por %p97, %p98
      %p100 = scmp.ne.s32.totalorder %s92, %s95
      %p101 = scmp.eq.s32.totalorder %s14, 0
      %p102 = por %p100, %p101
      %p103 = scmp.ne.s32.totalorder %s92, %s95
      %p104 = scmp.eq.s32.totalorder %s19, 1
      %p105 = por %p103, %p104
      %p106 = scmp.ne.s32.totalorder %s95, %s96
      %p107 = scmp.eq.s32.totalorder %s19, 0
      %p108 = por %p106, %p107
      %p109 = scmp.ne.s32.totalorder %s95, %s96
      %p110 = scmp.eq.s32.totalorder %s20, 1
      %p111 = por %p109, %p110
      %p113 = scmp.ne.s32.totalorder %s96, %s112
      %p114 = scmp.eq.s32.totalorder %s20, 0
      %p115 = por %p113, %p114
      %p116 = scmp.le.s32.totalorder 1, %s14
      %p117 = scmp.lt.s32.totalorder %s14, 3
      %p118 = pnand %p116, %p117
      %p119 = pneg %p118
      // Predicated region
      $region9: #{tpu_custom_call.1} parent=5 // pred_check
        _
      $region10: #{tpu_custom_call.1} parent=5 // pred_check_branch
        %121 = sbr.rel (%p118) target = $region12
      $region11: #{tpu_custom_call.1} parent=5 // pred_region
        %s122 = ssub.s32 %s14, 1
      $region12: #{tpu_custom_call.1} parent=5 // pred_fallthru
        _
      %p123 = scmp.lt.s32.totalorder %s14, 2
      // Predicated region
      $region13: #{tpu_custom_call.1} parent=5 // pred_check
        %p124 = pneg %p123
      $region14: #{tpu_custom_call.1} parent=5 // pred_check_branch
        %126 = sbr.rel (%p124) target = $region16
      $region15: #{tpu_custom_call.1} parent=5 // pred_region
        // Predicated region
        $region17: #{tpu_custom_call.1} parent=15 // pred_check
          %p127 = pneg %p46
        $region18: #{tpu_custom_call.1} parent=15 // pred_check_branch
          %129 = sbr.rel (%p127) target = $region20
        $region19: #{tpu_custom_call.1} parent=15 // pred_region
          %p130 = scmp.lt.s32.totalorder %s21, 1
          %s131 = scalar_select %p130, %s21, 1
          %s132 = smul.addr %s131, 8
          %s133 = scalar_lea.vmem %s0, %s132
        $region20: #{tpu_custom_call.1} parent=15 // pred_fallthru
          _
        // Predicated region
        $region21: #{tpu_custom_call.1} parent=15 // pred_check
          %p134 = pneg %p74
        $region22: #{tpu_custom_call.1} parent=15 // pred_check_branch
          %136 = sbr.rel (%p134) target = $region24
        $region23: #{tpu_custom_call.1} parent=15 // pred_region
          %s137 = sand.u32 %s64, 1
          %s138 = scalar_lea.sflag [#allocation3], %s137
          %s139 = sand.u32 %s64, 1
          %s140 = smul.addr %s139, 8
          %s141 = scalar_lea.vmem [#allocation2], %s140
          %s143 = ssub.s32 128, 128
          %144 = vsyncadd %s138, %s143
          %s145 = smul.addr %s22, 2
          %s146 = sadd.s32 %s21, %s145
          %s147 = smul.addr %s146, 128
          %s148 = scalar_lea.hbm %s1, %s147
          %s150 = sshll.u32 %s141, 4
          %s151 = int_to_ptr.vmem [resolvable:$true] %s150
          %153 = dma.hbm_to_vmem [thread:$0]  %s148, 128, %s151, %s138
        $region24: #{tpu_custom_call.1} parent=15 // pred_fallthru
          _
      $region16: #{tpu_custom_call.1} parent=5 // pred_fallthru
        _
      %p154 = scmp.le.s32.totalorder 1, %s14
      %p155 = scmp.lt.s32.totalorder %s14, 3
      %p156 = pnand %p154, %p155
      %p157 = pneg %p156
      // Predicated region
      $region25: #{tpu_custom_call.1} parent=5 // pred_check
        _
      $region26: #{tpu_custom_call.1} parent=5 // pred_check_branch
        %159 = sbr.rel (%p156) target = $region28
      $region27: #{tpu_custom_call.1} parent=5 // pred_region
        %s160 = ssub.s32 %s14, 1
        %s161 = sand.u32 %s67, 1
        %s162 = scalar_lea.sflag [#allocation3], %s161
        %s163 = sand.u32 %s67, 1
        %s164 = smul.addr %s163, 8
        %s165 = scalar_lea.vmem [#allocation2], %s164
        // Predicated region
        $region29: #{tpu_custom_call.1} parent=27 // pred_check
          %p166 = pneg %p80
        $region30: #{tpu_custom_call.1} parent=27 // pred_check_branch
          %168 = sbr.rel (%p166) target = $region32
        $region31: #{tpu_custom_call.1} parent=27 // pred_region
          %169 = dma.done %s162, 128
        $region32: #{tpu_custom_call.1} parent=27 // pred_fallthru
          _
        %p170 = scmp.lt.s32.totalorder %s23, 1
        %s171 = scalar_select %p170, %s23, 1
        %s172 = smul.addr %s171, 8
        %s173 = scalar_lea.vmem %s0, %s172
        %p174 = pneg %p52
        %p175 = pneg %p49
        %s176 = sand.u32 %s67, 1
        %s177 = scalar_lea.sflag [#allocation3], %s176
        %s178 = sand.u32 %s67, 1
        %s179 = smul.addr %s178, 8
        %s180 = scalar_lea.vmem [#allocation2], %s179
        %p181 = pneg %p80
        %p182 = pneg %p77
        %p183 = pneg %p108
        %p184 = pneg %p105
        %s185 = sand.u32 %s95, 1
        %s186 = scalar_lea.sflag [#allocation4], %s185
        %s187 = sand.u32 %s95, 1
        %s188 = smul.addr %s187, 8
        %s189 = scalar_lea.vmem [#allocation5], %s188
        %p190 = scmp.lt.s32.totalorder %s23, 1
        %s191 = scalar_select %p190, %s23, 1
        %s192 = smul.addr %s191, 8
        %s193 = scalar_lea.vmem %s0, %s192
        %v194 = vld [vmem:[%s193] sm:$0xff]
        %v195 = vld [vmem:[%s165] sm:$0xff]
        %v196 = vmul.f32 %v195, %v194
        %197 = vst [vmem:[%s189] sm:$0xff] %v196
        %s198 = sand.u32 %s95, 1
        %s199 = scalar_lea.sflag [#allocation4], %s198
        %s200 = sand.u32 %s95, 1
        %s201 = smul.addr %s200, 8
        %s202 = scalar_lea.vmem [#allocation5], %s201
        // Predicated region
        $region33: #{tpu_custom_call.1} parent=27 // pred_check
          %p203 = pneg %p105
        $region34: #{tpu_custom_call.1} parent=27 // pred_check_branch
          %205 = sbr.rel (%p203) target = $region36
        $region35: #{tpu_custom_call.1} parent=27 // pred_region
          %s207 = ssub.s32 128, 128
          %208 = vsyncadd %s199, %s207
          %s209 = smul.addr %s24, 2
          %s210 = sadd.s32 %s23, %s209
          %s211 = smul.addr %s210, 128
          %s212 = scalar_lea.hbm %s2, %s211
          %s214 = sshll.u32 %s202, 4
          %s215 = int_to_ptr.vmem [resolvable:$true] %s214
          %217 = dma.vmem_to_hbm [thread:$0]  %s215, 128, %s212, %s199
        $region36: #{tpu_custom_call.1} parent=27 // pred_fallthru
          _
      $region28: #{tpu_custom_call.1} parent=5 // pred_fallthru
        _
      %p218 = scmp.le.s32.totalorder 2, %s14
      // Predicated region
      $region37: #{tpu_custom_call.1} parent=5 // pred_check
        %p219 = pneg %p218
      $region38: #{tpu_custom_call.1} parent=5 // pred_check_branch
        %221 = sbr.rel (%p219) target = $region40
      $region39: #{tpu_custom_call.1} parent=5 // pred_region
        %s222 = ssub.s32 %s14, 2
        // Predicated region
        $region41: #{tpu_custom_call.1} parent=39 // pred_check
          %p223 = pneg %p111
        $region42: #{tpu_custom_call.1} parent=39 // pred_check_branch
          %225 = sbr.rel (%p223) target = $region44
        $region43: #{tpu_custom_call.1} parent=39 // pred_region
          %s226 = sand.u32 %s96, 1
          %s227 = scalar_lea.sflag [#allocation4], %s226
          %s228 = sand.u32 %s96, 1
          %s229 = smul.addr %s228, 8
          %s230 = scalar_lea.vmem [#allocation5], %s229
          %231 = dma.done %s227, 128
        $region44: #{tpu_custom_call.1} parent=39 // pred_fallthru
          _
      $region40: #{tpu_custom_call.1} parent=5 // pred_fallthru
        _
    $region6: #{tpu_custom_call.1} parent=1 // loop_footer
      %s18 = sadd.s32 1, %s14
    $region7: #{tpu_custom_call.1} parent=1 // loop_footer_branch
      %13 = sbr.rel target = $region3
    $region8: #{tpu_custom_call.1} parent=1 // loop_exit
      _
    %232 = vsyncpa [#allocation3], 1
    %s233 = scalar_lea.sflag [#allocation3], 1
    %234 = vsyncpa %s233, 1
    %235 = vsyncpa [#allocation4], 1
    %s236 = scalar_lea.sflag [#allocation4], 1
    %237 = vsyncpa %s236, 1

</llo_original>
